<compile_context>
chip_gen: v6e
topology: v6e:2x2x1
jax: 0.10.0
libtpu: 0.0.40
codegen_flags: <defaults>
</compile_context>

<pallas_src>
import functools

import jax
import jax.numpy as jnp
from jax.experimental import pallas as pl
from jax.experimental.pallas import tpu as pltpu


def _round_up(x, m):
    return ((x + m - 1) // m) * m


def mlp_kernel(cur_ref, nxt_ref, w1a_ref, w1b_ref, b1_ref,
               w2_ref, b2_ref, w3_ref, b3_ref, o_ref):
    # Layer 1 with fused concat: x @ W1 == cur @ W1a + nxt @ W1b.
    h1 = (jnp.dot(cur_ref[...], w1a_ref[...], preferred_element_type=jnp.float32)
          + jnp.dot(nxt_ref[...], w1b_ref[...], preferred_element_type=jnp.float32)
          + b1_ref[...])
    h1 = jnp.maximum(h1, 0.0).astype(w2_ref.dtype)          # bf16 back into MXU
    # Layer 2
    h2 = jnp.dot(h1, w2_ref[...], preferred_element_type=jnp.float32) + b2_ref[...]
    h2 = jnp.maximum(h2, 0.0).astype(w3_ref.dtype)
    # Layer 3 (output padded to a lane-dense width; zero columns sliced off
    # in the wrapper).
    y = jnp.dot(h2, w3_ref[...], preferred_element_type=jnp.float32) + b3_ref[...]
    o_ref[...] = y.astype(o_ref.dtype)


@functools.partial(jax.jit, static_argnames=("block_b",))
def mlp_forward(current_state, next_state, params, block_b=None):
    w1, b1, w2, b2, w3, b3 = params
    B, d_cur = current_state.shape
    _, d_nxt = next_state.shape
    in_size = d_cur + d_nxt
    hidden = w1.shape[1]
    out_size = w3.shape[1]

    # ---- tiling --------------------------------------------------------
    # Fill the MXU's systolic rows: 256 covers v6e/v7x (2x256 MXU) and is a
    # multiple of v5e's 128. Clamp to the (16-aligned) batch for small demos.
    if block_b is None:
        block_b = 256
    block_b = max(16, _round_up(min(block_b, _round_up(B, 16)), 16))
    B_pad = _round_up(B, block_b)
    grid = (B_pad // block_b,)

    # Lane-dense output: pad final layer to a multiple of 128 lanes so every
    # output store is an unmasked full-width vst.
    out_pad = _round_up(out_size, 128)

    # ---- operand prep (once, outside the grid loop) ---------------------
    cdt = jnp.bfloat16                       # bf16 operands, f32 accumulation
    cur = current_state.astype(cdt)
    nxt = next_state.astype(cdt)
    if B_pad != B:
        cur = jnp.pad(cur, ((0, B_pad - B), (0, 0)))
        nxt = jnp.pad(nxt, ((0, B_pad - B), (0, 0)))

    # Split W1 row-wise instead of concatenating activations.
    w1a = w1[:d_cur].astype(cdt)
    w1b = w1[d_cur:].astype(cdt)
    w2c = w2.astype(cdt)
    w3c = jnp.pad(w3, ((0, 0), (0, out_pad - out_size))).astype(cdt)
    b1f = b1.astype(jnp.float32)
    b2f = b2.astype(jnp.float32)
    b3f = jnp.pad(b3, ((0, 0), (0, out_pad - out_size))).astype(jnp.float32)

    rows = lambda i: (i, 0)        # activation tiles walk the batch axis
    full = lambda i: (0, 0)        # weights/biases: grid-invariant, VMEM-resident

    # Advisory cost for XLA's scheduler.
    flops = 2 * B_pad * (in_size * hidden + hidden * hidden + hidden * out_pad)
    bytes_accessed = (
        (cur.size + nxt.size) * 2
        + (w1a.size + w1b.size + w2c.size + w3c.size) * 2
        + (b1f.size + b2f.size + b3f.size) * 4
        + B_pad * out_pad * 4)

    out = pl.pallas_call(
        mlp_kernel,
        out_shape=jax.ShapeDtypeStruct((B_pad, out_pad), jnp.float32),
        grid_spec=pltpu.PrefetchScalarGridSpec(
            num_scalar_prefetch=0,
            grid=grid,
            in_specs=[
                pl.BlockSpec((block_b, d_cur), rows),     # current_state tile
                pl.BlockSpec((block_b, d_nxt), rows),     # next_state tile
                pl.BlockSpec((d_cur, hidden), full),      # W1a
                pl.BlockSpec((d_nxt, hidden), full),      # W1b
                pl.BlockSpec((1, hidden), full),          # b1
                pl.BlockSpec((hidden, hidden), full),     # W2
                pl.BlockSpec((1, hidden), full),          # b2
                pl.BlockSpec((hidden, out_pad), full),    # W3 (lane-padded)
                pl.BlockSpec((1, out_pad), full),         # b3 (lane-padded)
            ],
            out_specs=pl.BlockSpec((block_b, out_pad), rows),
        ),
        compiler_params=pltpu.CompilerParams(
            dimension_semantics=("parallel",),
            # Explicit VMEM budget (fits v7x's 64 MiB / default 32 MiB scoped
            # limit with large headroom: weights <1 MiB bf16, activations
            # ~block_b*hidden*4 B per intermediate).
            vmem_limit_bytes=32 * 1024 * 1024,
        ),
        cost_estimate=pl.CostEstimate(
            flops=flops, transcendentals=0, bytes_accessed=bytes_accessed),
    )(cur, nxt, w1a, w1b, b1f, w2c, b2f, w3c, b3f)

    return out[:B, :out_size]


def init_params(key, input_size, output_size, hidden_size):
    """Deterministic synthetic init (same shapes as nn.Linear layers),
    stored as (in_features, out_features) so the kernel does x @ W + b."""
    ks = jax.random.split(key, 6)

    def lin(kw, kb, fan_in, fan_out):
        bound = 1.0 / jnp.sqrt(fan_in)
        w = jax.random.uniform(kw, (fan_in, fan_out), jnp.float32, -bound, bound)
        b = jax.random.uniform(kb, (1, fan_out), jnp.float32, -bound, bound)
        return w, b

    w1, b1 = lin(ks[0], ks[1], input_size, hidden_size)
    w2, b2 = lin(ks[2], ks[3], hidden_size, hidden_size)
    w3, b3 = lin(ks[4], ks[5], hidden_size, output_size)
    return (w1, b1, w2, b2, w3, b3)


def mlp_reference(current_state, next_state, params):
    w1, b1, w2, b2, w3, b3 = params
    x = jnp.concatenate([current_state, next_state], axis=-1)
    h1 = jnp.maximum(x @ w1 + b1, 0.0)
    h2 = jnp.maximum(h1 @ w2 + b2, 0.0)
    return h2 @ w3 + b3


if __name__ == "__main__":
    key = jax.random.PRNGKey(0)
    k_cur, k_next, k_par = jax.random.split(key, 3)

    batch = 32
    state_dim = 16                 # each of current_state / next_state
    input_size = 2 * state_dim     # after (fused) concat
    hidden_size = 128              # kept small for the demo (torch default 512)
    output_size = 8

    current_state = jax.random.normal(k_cur, (batch, state_dim), jnp.float32)
    next_state = jax.random.normal(k_next, (batch, state_dim), jnp.float32)
    params = init_params(k_par, input_size, output_size, hidden_size)

    out = mlp_forward(current_state, next_state, params)
    out = jax.block_until_ready(out)

    ref = mlp_reference(current_state, next_state, params)
    assert out.shape == (batch, output_size)
    max_err = float(jnp.max(jnp.abs(out - ref)))
    # bf16 operands with f32 accumulation -> loosened tolerance vs f32 reference.
    assert max_err < 5e-2, f"mismatch vs reference: max abs err {max_err}"

    print("KERNEL_OK")
</pallas_src>

<mosaic_0001>
module attributes {stable_mosaic.version = 11 : i64} {
  func.func @mlp_kernel(%arg0: i32, %arg1: memref<32x16xbf16, #tpu.memory_space<vmem>>, %arg2: memref<32x16xbf16, #tpu.memory_space<vmem>>, %arg3: memref<16x128xbf16, #tpu.memory_space<vmem>>, %arg4: memref<16x128xbf16, #tpu.memory_space<vmem>>, %arg5: memref<1x128xf32, #tpu.memory_space<vmem>>, %arg6: memref<128x128xbf16, #tpu.memory_space<vmem>>, %arg7: memref<1x128xf32, #tpu.memory_space<vmem>>, %arg8: memref<128x128xbf16, #tpu.memory_space<vmem>>, %arg9: memref<1x128xf32, #tpu.memory_space<vmem>>, %arg10: memref<32x128xf32, #tpu.memory_space<vmem>>) attributes {dimension_semantics = [#tpu.dimension_semantics<parallel>], iteration_bounds = array<i64: 1>, scalar_prefetch = 0 : i64, scratch_operands = 0 : i64, tpu.core_type = #tpu.core_type<tc>, window_params = [{transform_indices = @transform_0, window_bounds = array<i64: 32, 16>}, {transform_indices = @transform_1, window_bounds = array<i64: 32, 16>}, {pipeline_mode = #tpu.pipeline_mode<synchronous>, transform_indices = @transform_2, window_bounds = array<i64: 16, 128>}, {pipeline_mode = #tpu.pipeline_mode<synchronous>, transform_indices = @transform_3, window_bounds = array<i64: 16, 128>}, {pipeline_mode = #tpu.pipeline_mode<synchronous>, transform_indices = @transform_4, window_bounds = array<i64: 1, 128>}, {pipeline_mode = #tpu.pipeline_mode<synchronous>, transform_indices = @transform_5, window_bounds = array<i64: 128, 128>}, {pipeline_mode = #tpu.pipeline_mode<synchronous>, transform_indices = @transform_6, window_bounds = array<i64: 1, 128>}, {pipeline_mode = #tpu.pipeline_mode<synchronous>, transform_indices = @transform_7, window_bounds = array<i64: 128, 128>}, {pipeline_mode = #tpu.pipeline_mode<synchronous>, transform_indices = @transform_8, window_bounds = array<i64: 1, 128>}, {transform_indices = @transform_9, window_bounds = array<i64: 32, 128>}]} {
    %c0 = arith.constant 0 : index
    %c0_0 = arith.constant 0 : index
    %0 = vector.load %arg1[%c0, %c0_0] : memref<32x16xbf16, #tpu.memory_space<vmem>>, vector<32x16xbf16>
    %c0_1 = arith.constant 0 : index
    %c0_2 = arith.constant 0 : index
    %1 = vector.load %arg3[%c0_1, %c0_2] : memref<16x128xbf16, #tpu.memory_space<vmem>>, vector<16x128xbf16>
    %cst = arith.constant dense<0.000000e+00> : vector<32x128xf32>
    %2 = tpu.matmul %0, %1, %cst {dimension_numbers = #tpu.dot_dimension_numbers<[1], [0], [0], [1], [0, 0, 1, 1], [], []>} : vector<32x16xbf16>, vector<16x128xbf16>, vector<32x128xf32> -> vector<32x128xf32>
    %c0_3 = arith.constant 0 : index
    %c0_4 = arith.constant 0 : index
    %3 = vector.load %arg2[%c0_3, %c0_4] : memref<32x16xbf16, #tpu.memory_space<vmem>>, vector<32x16xbf16>
    %c0_5 = arith.constant 0 : index
    %c0_6 = arith.constant 0 : index
    %4 = vector.load %arg4[%c0_5, %c0_6] : memref<16x128xbf16, #tpu.memory_space<vmem>>, vector<16x128xbf16>
    %cst_7 = arith.constant dense<0.000000e+00> : vector<32x128xf32>
    %5 = tpu.matmul %3, %4, %cst_7 {dimension_numbers = #tpu.dot_dimension_numbers<[1], [0], [0], [1], [0, 0, 1, 1], [], []>} : vector<32x16xbf16>, vector<16x128xbf16>, vector<32x128xf32> -> vector<32x128xf32>
    %6 = arith.addf %2, %5 : vector<32x128xf32>
    %c0_8 = arith.constant 0 : index
    %c0_9 = arith.constant 0 : index
    %7 = vector.load %arg5[%c0_8, %c0_9] : memref<1x128xf32, #tpu.memory_space<vmem>>, vector<1x128xf32>
    %8 = vector.broadcast %7 : vector<1x128xf32> to vector<32x128xf32>
    %9 = arith.addf %6, %8 : vector<32x128xf32>
    %cst_10 = arith.constant 0.000000e+00 : f32
    %10 = vector.broadcast %cst_10 : f32 to vector<32x128xf32>
    %11 = arith.maximumf %9, %10 : vector<32x128xf32>
    %12 = arith.truncf %11 : vector<32x128xf32> to vector<32x128xbf16>
    %c0_11 = arith.constant 0 : index
    %c0_12 = arith.constant 0 : index
    %13 = vector.load %arg6[%c0_11, %c0_12] : memref<128x128xbf16, #tpu.memory_space<vmem>>, vector<128x128xbf16>
    %cst_13 = arith.constant dense<0.000000e+00> : vector<32x128xf32>
    %14 = tpu.matmul %12, %13, %cst_13 {dimension_numbers = #tpu.dot_dimension_numbers<[1], [0], [0], [1], [0, 0, 1, 1], [], []>} : vector<32x128xbf16>, vector<128x128xbf16>, vector<32x128xf32> -> vector<32x128xf32>
    %c0_14 = arith.constant 0 : index
    %c0_15 = arith.constant 0 : index
    %15 = vector.load %arg7[%c0_14, %c0_15] : memref<1x128xf32, #tpu.memory_space<vmem>>, vector<1x128xf32>
    %16 = vector.broadcast %15 : vector<1x128xf32> to vector<32x128xf32>
    %17 = arith.addf %14, %16 : vector<32x128xf32>
    %cst_16 = arith.constant 0.000000e+00 : f32
    %18 = vector.broadcast %cst_16 : f32 to vector<32x128xf32>
    %19 = arith.maximumf %17, %18 : vector<32x128xf32>
    %20 = arith.truncf %19 : vector<32x128xf32> to vector<32x128xbf16>
    %c0_17 = arith.constant 0 : index
    %c0_18 = arith.constant 0 : index
    %21 = vector.load %arg8[%c0_17, %c0_18] : memref<128x128xbf16, #tpu.memory_space<vmem>>, vector<128x128xbf16>
    %cst_19 = arith.constant dense<0.000000e+00> : vector<32x128xf32>
    %22 = tpu.matmul %20, %21, %cst_19 {dimension_numbers = #tpu.dot_dimension_numbers<[1], [0], [0], [1], [0, 0, 1, 1], [], []>} : vector<32x128xbf16>, vector<128x128xbf16>, vector<32x128xf32> -> vector<32x128xf32>
    %c0_20 = arith.constant 0 : index
    %c0_21 = arith.constant 0 : index
    %23 = vector.load %arg9[%c0_20, %c0_21] : memref<1x128xf32, #tpu.memory_space<vmem>>, vector<1x128xf32>
    %24 = vector.broadcast %23 : vector<1x128xf32> to vector<32x128xf32>
    %25 = arith.addf %22, %24 : vector<32x128xf32>
    %c0_22 = arith.constant 0 : index
    %c0_23 = arith.constant 0 : index
    %26 = vector.load %arg10[%c0_22, %c0_23] : memref<32x128xf32, #tpu.memory_space<vmem>>, vector<32x128xf32>
    tpu.vector_store %arg10[%c0_22, %c0_23], %25 {strides = array<i32>} : memref<32x128xf32, #tpu.memory_space<vmem>>, vector<32x128xf32>,
    return
  }
  func.func @transform_0(%arg0: i32) -> (i32, i32) {
    %c0_i32 = arith.constant 0 : i32
    %c0_i32_0 = arith.constant 0 : i32
    return %arg0, %c0_i32 : i32, i32
  }
  func.func @transform_1(%arg0: i32) -> (i32, i32) {
    %c0_i32 = arith.constant 0 : i32
    %c0_i32_0 = arith.constant 0 : i32
    return %arg0, %c0_i32 : i32, i32
  }
  func.func @transform_2(%arg0: i32) -> (i32, i32) {
    %c0_i32 = arith.constant 0 : i32
    %c0_i32_0 = arith.constant 0 : i32
    %c0_i32_1 = arith.constant 0 : i32
    return %c0_i32, %c0_i32_0 : i32, i32
  }
  func.func @transform_3(%arg0: i32) -> (i32, i32) {
    %c0_i32 = arith.constant 0 : i32
    %c0_i32_0 = arith.constant 0 : i32
    %c0_i32_1 = arith.constant 0 : i32
    return %c0_i32, %c0_i32_0 : i32, i32
  }
  func.func @transform_4(%arg0: i32) -> (i32, i32) {
    %c0_i32 = arith.constant 0 : i32
    %c0_i32_0 = arith.constant 0 : i32
    %c0_i32_1 = arith.constant 0 : i32
    return %c0_i32, %c0_i32_0 : i32, i32
  }
  func.func @transform_5(%arg0: i32) -> (i32, i32) {
    %c0_i32 = arith.constant 0 : i32
    %c0_i32_0 = arith.constant 0 : i32
    %c0_i32_1 = arith.constant 0 : i32
    return %c0_i32, %c0_i32_0 : i32, i32
  }
  func.func @transform_6(%arg0: i32) -> (i32, i32) {
    %c0_i32 = arith.constant 0 : i32
    %c0_i32_0 = arith.constant 0 : i32
    %c0_i32_1 = arith.constant 0 : i32
    return %c0_i32, %c0_i32_0 : i32, i32
  }
  func.func @transform_7(%arg0: i32) -> (i32, i32) {
    %c0_i32 = arith.constant 0 : i32
    %c0_i32_0 = arith.constant 0 : i32
    %c0_i32_1 = arith.constant 0 : i32
    return %c0_i32, %c0_i32_0 : i32, i32
  }
  func.func @transform_8(%arg0: i32) -> (i32, i32) {
    %c0_i32 = arith.constant 0 : i32
    %c0_i32_0 = arith.constant 0 : i32
    %c0_i32_1 = arith.constant 0 : i32
    return %c0_i32, %c0_i32_0 : i32, i32
  }
  func.func @transform_9(%arg0: i32) -> (i32, i32) {
    %c0_i32 = arith.constant 0 : i32
    %c0_i32_0 = arith.constant 0 : i32
    return %arg0, %c0_i32 : i32, i32
  }
}

</mosaic_0001>

<llo_original>
// kernel: mlp_forward.1
$region0: #{mlp_forward.1}
  #allocation0 [shape = 'u32[]', space=smem, size = 0x4, offset = 0x4, fixed_abs, tag = 'smem constant byte address 0x4 - core index']
  #allocation1 [shape = 'u32[144,128]{1,0:T(1,128)}', space=vmem, size = 0x12000, scoped, tag = 'internal scratch']
  %s0 = inlined_call_operand.vmem [shape: bf16[32,16], index: 0, kind: input, shape index: {}]
  %s1 = inlined_call_operand.vmem [shape: bf16[32,16], index: 1, kind: input, shape index: {}]
  %s2 = inlined_call_operand.vmem [shape: bf16[16,128], index: 2, kind: input, shape index: {}]
  %s3 = inlined_call_operand.vmem [shape: bf16[16,128], index: 3, kind: input, shape index: {}]
  %s4 = inlined_call_operand.vmem [shape: f32[1,128], index: 4, kind: input, shape index: {}]
  %s5 = inlined_call_operand.vmem [shape: bf16[128,128], index: 5, kind: input, shape index: {}]
  %s6 = inlined_call_operand.vmem [shape: f32[1,128], index: 6, kind: input, shape index: {}]
  %s7 = inlined_call_operand.vmem [shape: bf16[128,128], index: 7, kind: input, shape index: {}]
  %s8 = inlined_call_operand.vmem [shape: f32[1,128], index: 8, kind: input, shape index: {}]
  %s9 = inlined_call_operand.vmem [shape: f32[32,128], index: 9, kind: output, shape index: {}]
  %s10 = sld [smem:[#allocation0]]
  $region46: #{mlp_forward.1} parent=0
    _
  %s12 = ssub.s32 1, %s10
  %s13 = scalar_select 0, %s12, %s10
  // Predicated region
  $region2: #{mlp_forward.1} parent=0 // pred_check
    _
  $region3: #{mlp_forward.1} parent=0 // pred_check_branch
    %15 = sbr.rel (0) target = $region5
  $region4: #{mlp_forward.1} parent=0 // pred_region
    _
  $region5: #{mlp_forward.1} parent=0 // pred_fallthru
    _
  // Predicated region
  $region6: #{mlp_forward.1} parent=0 // pred_check
    _
  $region7: #{mlp_forward.1} parent=0 // pred_check_branch
    %17 = sbr.rel (0) target = $region9
  $region8: #{mlp_forward.1} parent=0 // pred_region
    _
  $region9: #{mlp_forward.1} parent=0 // pred_fallthru
    _
  // Predicated region
  $region10: #{mlp_forward.1} parent=0 // pred_check
    _
  $region11: #{mlp_forward.1} parent=0 // pred_check_branch
    %19 = sbr.rel (0) target = $region13
  $region12: #{mlp_forward.1} parent=0 // pred_region
    _
  $region13: #{mlp_forward.1} parent=0 // pred_fallthru
    _
  // Predicated region
  $region14: #{mlp_forward.1} parent=0 // pred_check
    _
  $region15: #{mlp_forward.1} parent=0 // pred_check_branch
    %21 = sbr.rel (0) target = $region17
  $region16: #{mlp_forward.1} parent=0 // pred_region
    _
  $region17: #{mlp_forward.1} parent=0 // pred_fallthru
    _
  // Predicated region
  $region18: #{mlp_forward.1} parent=0 // pred_check
    _
  $region19: #{mlp_forward.1} parent=0 // pred_check_branch
    %23 = sbr.rel (0) target = $region21
  $region20: #{mlp_forward.1} parent=0 // pred_region
    _
  $region21: #{mlp_forward.1} parent=0 // pred_fallthru
    _
  // Predicated region
  $region22: #{mlp_forward.1} parent=0 // pred_check
    _
  $region23: #{mlp_forward.1} parent=0 // pred_check_branch
    %25 = sbr.rel (0) target = $region25
  $region24: #{mlp_forward.1} parent=0 // pred_region
    _
  $region25: #{mlp_forward.1} parent=0 // pred_fallthru
    _
  // Predicated region
  $region26: #{mlp_forward.1} parent=0 // pred_check
    _
  $region27: #{mlp_forward.1} parent=0 // pred_check_branch
    %27 = sbr.rel (0) target = $region29
  $region28: #{mlp_forward.1} parent=0 // pred_region
    _
  $region29: #{mlp_forward.1} parent=0 // pred_fallthru
    _
  // Predicated region
  $region30: #{mlp_forward.1} parent=0 // pred_check
    _
  $region31: #{mlp_forward.1} parent=0 // pred_check_branch
    %29 = sbr.rel (0) target = $region33
  $region32: #{mlp_forward.1} parent=0 // pred_region
    _
  $region33: #{mlp_forward.1} parent=0 // pred_fallthru
    _
  // Predicated region
  $region34: #{mlp_forward.1} parent=0 // pred_check
    _
  $region35: #{mlp_forward.1} parent=0 // pred_check_branch
    %31 = sbr.rel (0) target = $region37
  $region36: #{mlp_forward.1} parent=0 // pred_region
    _
  $region37: #{mlp_forward.1} parent=0 // pred_fallthru
    _
  %v33 = vld [vmem:[%s0] sm:$0xf]
  %v34 = vld [vmem:[%s0 + $0x4] sm:$0xf]
  %v35 = vld [vmem:[%s0 + $0x8] sm:$0xf]
  %v36 = vld [vmem:[%s0 + $0xc] sm:$0xf]
  %v37 = vld [vmem:[%s2] sm:$0xf]
  %v38 = vld [vmem:[%s2 + $0x4] sm:$0xf]
  %v39 = vld [vmem:[%s1] sm:$0xf]
  %v40 = vld [vmem:[%s1 + $0x4] sm:$0xf]
  %v41 = vld [vmem:[%s1 + $0x8] sm:$0xf]
  %v42 = vld [vmem:[%s1 + $0xc] sm:$0xf]
  %v43 = vld [vmem:[%s3] sm:$0xf]
  %v44 = vld [vmem:[%s3 + $0x4] sm:$0xf]
  %v49 = vunpack.c.l.b16 %v39
  %v50 = vunpack.c.l.b16 %v40
  %v51 = vunpack.c.l.b16 %v41
  %v52 = vunpack.c.l.b16 %v42
  %v53 = vpack.c.b16 %v50, %v49
  %v54 = vpack.c.b16 %v52, %v51
  %v57 = vunpack.c.l.b16 %v43
  %v58 = vunpack.c.l.b16 %v44
  %v59 = vpack.c.b16 %v58, %v57
  %vm61 = vcmask 130048
  %v63 = vsel %vm61, %v53, 0
  %v66 = vsel %vm61, %v54, 0
  %68 = vmatprep.subr.bf16.mxu0 0
  %69 = vmatpush1.bf16.msra.mxu0 0
  %70 = vmatprep.subr.bf16.mxu0 0
  %71 = vmatpush1.bf16.msra.mxu0 0
  %72 = vmatprep.subr.bf16.mxu0 0
  %73 = vmatpush1.bf16.msra.mxu0 0
  %74 = vmatprep.subr.bf16.mxu0 0
  %75 = vmatpush1.bf16.msra.mxu0 0
  %76 = vmatprep.subr.bf16.mxu0 0
  %77 = vmatpush1.bf16.msra.mxu0 0
  %78 = vmatprep.subr.bf16.mxu0 0
  %79 = vmatpush1.bf16.msra.mxu0 0
  %80 = vmatprep.subr.bf16.mxu0 0
  %81 = vmatpush1.bf16.msra.mxu0 0
  %82 = vmatprep.subr.bf16.mxu0 0
  %83 = vmatpush1.bf16.msra.mxu0 %v59
  %84 = vmatprep.subr.bf16.mxu0 0
  %85 = vmatpush2.bf16.msra.mxu0 0
  %86 = vmatprep.subr.bf16.mxu0 0
  %87 = vmatpush2.bf16.msra.mxu0 0
  %88 = vmatprep.subr.bf16.mxu0 0
  %89 = vmatpush2.bf16.msra.mxu0 0
  %90 = vmatprep.subr.bf16.mxu0 0
  %91 = vmatpush2.bf16.msra.mxu0 0
  %92 = vmatprep.subr.bf16.mxu0 0
  %93 = vmatpush2.bf16.msra.mxu0 0
  %94 = vmatprep.subr.bf16.mxu0 0
  %95 = vmatpush2.bf16.msra.mxu0 0
  %96 = vmatprep.subr.bf16.mxu0 0
  %97 = vmatpush2.bf16.msra.mxu0 0
  %98 = vmatprep.subr.bf16.mxu0 0
  %99 = vmatpush2.bf16.msra.mxu0 0
  %100 = vmatprep.mubr.bf16.mxu0 0
  %101 = vmatmul.mubr.bf16.gmra.mxu0 %v63
  %v102 = vpop.f32.mrf.mxu0
  %v103 = vadd.f32 0.0, %v102
  %v104 = vpop.f32.mrf.mxu0
  %v105 = vpop.f32.mrf.mxu0
  %v106 = vadd.f32 0.0, %v105
  %v107 = vpop.f32.mrf.mxu0
  %108 = vmatprep.mubr.bf16.mxu0 0
  %109 = vmatmul.mubr.bf16.gmra.mxu0 %v66
  %v110 = vpop.f32.mrf.mxu0
  %v111 = vadd.f32 0.0, %v110
  %v112 = vpop.f32.mrf.mxu0
  %v113 = vpop.f32.mrf.mxu0
  %v114 = vadd.f32 0.0, %v113
  %v115 = vpop.f32.mrf.mxu0
  %116 = vdwg.mxu0
  %v121 = vunpack.c.l.b16 %v33
  %v122 = vunpack.c.l.b16 %v34
  %v123 = vunpack.c.l.b16 %v35
  %v124 = vunpack.c.l.b16 %v36
  %v125 = vpack.c.b16 %v122, %v121
  %v126 = vpack.c.b16 %v124, %v123
  %v129 = vunpack.c.l.b16 %v37
  %v130 = vunpack.c.l.b16 %v38
  %v131 = vpack.c.b16 %v130, %v129
  %v134 = vsel %vm61, %v125, 0
  %v137 = vsel %vm61, %v126, 0
  %139 = vmatprep.subr.bf16.mxu0 0
  %140 = vmatpush1.bf16.msra.mxu0 0
  %141 = vmatprep.subr.bf16.mxu0 0
  %142 = vmatpush1.bf16.msra.mxu0 0
  %143 = vmatprep.subr.bf16.mxu0 0
  %144 = vmatpush1.bf16.msra.mxu0 0
  %145 = vmatprep.subr.bf16.mxu0 0
  %146 = vmatpush1.bf16.msra.mxu0 0
  %147 = vmatprep.subr.bf16.mxu0 0
  %148 = vmatpush1.bf16.msra.mxu0 0
  %149 = vmatprep.subr.bf16.mxu0 0
  %150 = vmatpush1.bf16.msra.mxu0 0
  %151 = vmatprep.subr.bf16.mxu0 0
  %152 = vmatpush1.bf16.msra.mxu0 0
  %153 = vmatprep.subr.bf16.mxu0 0
  %154 = vmatpush1.bf16.msra.mxu0 %v131
  %155 = vmatprep.subr.bf16.mxu0 0
  %156 = vmatpush2.bf16.msra.mxu0 0
  %157 = vmatprep.subr.bf16.mxu0 0
  %158 = vmatpush2.bf16.msra.mxu0 0
  %159 = vmatprep.subr.bf16.mxu0 0
  %160 = vmatpush2.bf16.msra.mxu0 0
  %161 = vmatprep.subr.bf16.mxu0 0
  %162 = vmatpush2.bf16.msra.mxu0 0
  %163 = vmatprep.subr.bf16.mxu0 0
  %164 = vmatpush2.bf16.msra.mxu0 0
  %165 = vmatprep.subr.bf16.mxu0 0
  %166 = vmatpush2.bf16.msra.mxu0 0
  %167 = vmatprep.subr.bf16.mxu0 0
  %168 = vmatpush2.bf16.msra.mxu0 0
  %169 = vmatprep.subr.bf16.mxu0 0
  %170 = vmatpush2.bf16.msra.mxu0 0
  %171 = vmatprep.mubr.bf16.mxu0 0
  %172 = vmatmul.mubr.bf16.gmra.mxu0 %v134
  %v173 = vpop.f32.mrf.mxu0
  %v174 = vadd.f32 %v103, %v173
  %v175 = vpop.f32.mrf.mxu0
  %v176 = vpop.f32.mrf.mxu0
  %v177 = vadd.f32 %v106, %v176
  %v178 = vpop.f32.mrf.mxu0
  %179 = vmatprep.mubr.bf16.mxu0 0
  %180 = vmatmul.mubr.bf16.gmra.mxu0 %v137
  %v181 = vpop.f32.mrf.mxu0
  %v182 = vadd.f32 %v111, %v181
  %v183 = vpop.f32.mrf.mxu0
  %v184 = vpop.f32.mrf.mxu0
  %v185 = vadd.f32 %v114, %v184
  %v186 = vpop.f32.mrf.mxu0
  %187 = vdwg.mxu0
  %v188 = vld [vmem:[%s4] sm:$0x1]
  %v190 = vlaneseq
  %v191 = vshrl.u32 %v190, 7
  %v192 = vsub.s32 0, %v191
  %v193 = vrot.slane %v188, %v192
  %v195 = vadd.f32 %v174, %v193
  %v196 = vadd.f32 %v177, %v193
  %v197 = vadd.f32 %v182, %v193
  %v198 = vadd.f32 %v185, %v193
  %v199 = vmax.f32 %v195, 0.0
  %v200 = vmax.f32 %v196, 0.0
  %v201 = vmax.f32 %v197, 0.0
  %v202 = vmax.f32 %v198, 0.0
  %v203 = vpack.c.bf16 %v200, %v199
  %v204 = vpack.c.bf16 %v202, %v201
  %v205 = vld [vmem:[%s5] sm:$0xf]
  %v206 = vld [vmem:[%s5 + $0x4] sm:$0xf]
  %v207 = vld [vmem:[%s5 + $0x8] sm:$0xf]
  %v208 = vld [vmem:[%s5 + $0xc] sm:$0xf]
  %v209 = vld [vmem:[%s5 + $0x10] sm:$0xf]
  %v210 = vld [vmem:[%s5 + $0x14] sm:$0xf]
  %v211 = vld [vmem:[%s5 + $0x18] sm:$0xf]
  %v212 = vld [vmem:[%s5 + $0x1c] sm:$0xf]
  %v213 = vld [vmem:[%s5 + $0x20] sm:$0xf]
  %v214 = vld [vmem:[%s5 + $0x24] sm:$0xf]
  %v215 = vld [vmem:[%s5 + $0x28] sm:$0xf]
  %v216 = vld [vmem:[%s5 + $0x2c] sm:$0xf]
  %v217 = vld [vmem:[%s5 + $0x30] sm:$0xf]
  %v218 = vld [vmem:[%s5 + $0x34] sm:$0xf]
  %v219 = vld [vmem:[%s5 + $0x38] sm:$0xf]
  %v220 = vld [vmem:[%s5 + $0x3c] sm:$0xf]
  %v221 = vld [vmem:[%s6] sm:$0x1]
  %v223 = vlaneseq
  %v224 = vshrl.u32 %v223, 7
  %v225 = vsub.s32 0, %v224
  %v226 = vrot.slane %v221, %v225
  %v244 = vunpack.c.l.b16 %v205
  %v245 = vunpack.c.l.b16 %v206
  %v246 = vunpack.c.l.b16 %v207
  %v247 = vunpack.c.l.b16 %v208
  %v248 = vunpack.c.l.b16 %v209
  %v249 = vunpack.c.l.b16 %v210
  %v250 = vunpack.c.l.b16 %v211
  %v251 = vunpack.c.l.b16 %v212
  %v252 = vunpack.c.l.b16 %v213
  %v253 = vunpack.c.l.b16 %v214
  %v254 = vunpack.c.l.b16 %v215
  %v255 = vunpack.c.l.b16 %v216
  %v256 = vunpack.c.l.b16 %v217
  %v257 = vunpack.c.l.b16 %v218
  %v258 = vunpack.c.l.b16 %v219
  %v259 = vunpack.c.l.b16 %v220
  %v260 = vpack.c.b16 %v245, %v244
  %v261 = vpack.c.b16 %v247, %v246
  %v262 = vpack.c.b16 %v249, %v248
  %v263 = vpack.c.b16 %v251, %v250
  %v264 = vpack.c.b16 %v253, %v252
  %v265 = vpack.c.b16 %v255, %v254
  %v266 = vpack.c.b16 %v257, %v256
  %v267 = vpack.c.b16 %v259, %v258
  %276 = vmatprep.subr.bf16.mxu0 0
  %277 = vmatpush1.bf16.msra.mxu0 %v267
  %278 = vmatprep.subr.bf16.mxu0 0
  %279 = vmatpush1.bf16.msra.mxu0 %v266
  %280 = vmatprep.subr.bf16.mxu0 0
  %281 = vmatpush1.bf16.msra.mxu0 %v265
  %282 = vmatprep.subr.bf16.mxu0 0
  %283 = vmatpush1.bf16.msra.mxu0 %v264
  %284 = vmatprep.subr.bf16.mxu0 0
  %285 = vmatpush1.bf16.msra.mxu0 %v263
  %286 = vmatprep.subr.bf16.mxu0 0
  %287 = vmatpush1.bf16.msra.mxu0 %v262
  %288 = vmatprep.subr.bf16.mxu0 0
  %289 = vmatpush1.bf16.msra.mxu0 %v261
  %290 = vmatprep.subr.bf16.mxu0 0
  %291 = vmatpush1.bf16.msra.mxu0 %v260
  %292 = vmatprep.subr.bf16.mxu0 0
  %293 = vmatpush2.bf16.msra.mxu0 0
  %294 = vmatprep.subr.bf16.mxu0 0
  %295 = vmatpush2.bf16.msra.mxu0 0
  %296 = vmatprep.subr.bf16.mxu0 0
  %297 = vmatpush2.bf16.msra.mxu0 0
  %298 = vmatprep.subr.bf16.mxu0 0
  %299 = vmatpush2.bf16.msra.mxu0 0
  %300 = vmatprep.subr.bf16.mxu0 0
  %301 = vmatpush2.bf16.msra.mxu0 0
  %302 = vmatprep.subr.bf16.mxu0 0
  %303 = vmatpush2.bf16.msra.mxu0 0
  %304 = vmatprep.subr.bf16.mxu0 0
  %305 = vmatpush2.bf16.msra.mxu0 0
  %306 = vmatprep.subr.bf16.mxu0 0
  %307 = vmatpush2.bf16.msra.mxu0 0
  %308 = vmatprep.mubr.bf16.mxu0 0
  %309 = vmatmul.mubr.bf16.gmra.mxu0 %v203
  %v310 = vpop.f32.mrf.mxu0
  %v311 = vadd.f32 %v226, %v310
  %v312 = vpop.f32.mrf.mxu0
  %v313 = vpop.f32.mrf.mxu0
  %v314 = vadd.f32 %v226, %v313
  %v315 = vpop.f32.mrf.mxu0
  %316 = vmatprep.mubr.bf16.mxu0 0
  %317 = vmatmul.mubr.bf16.gmra.mxu0 %v204
  %v318 = vpop.f32.mrf.mxu0
  %v319 = vadd.f32 %v226, %v318
  %v320 = vpop.f32.mrf.mxu0
  %v321 = vpop.f32.mrf.mxu0
  %v322 = vadd.f32 %v226, %v321
  %v323 = vpop.f32.mrf.mxu0
  %324 = vdwg.mxu0
  %v325 = vmax.f32 %v311, 0.0
  %v326 = vmax.f32 %v314, 0.0
  %v327 = vmax.f32 %v319, 0.0
  %v328 = vmax.f32 %v322, 0.0
  %v329 = vpack.c.bf16 %v326, %v325
  %v330 = vpack.c.bf16 %v328, %v327
  %v331 = vld [vmem:[%s7] sm:$0xf]
  %v332 = vld [vmem:[%s7 + $0x4] sm:$0xf]
  %v333 = vld [vmem:[%s7 + $0x8] sm:$0xf]
  %v334 = vld [vmem:[%s7 + $0xc] sm:$0xf]
  %v335 = vld [vmem:[%s7 + $0x10] sm:$0xf]
  %v336 = vld [vmem:[%s7 + $0x14] sm:$0xf]
  %v337 = vld [vmem:[%s7 + $0x18] sm:$0xf]
  %v338 = vld [vmem:[%s7 + $0x1c] sm:$0xf]
  %v339 = vld [vmem:[%s7 + $0x20] sm:$0xf]
  %v340 = vld [vmem:[%s7 + $0x24] sm:$0xf]
  %v341 = vld [vmem:[%s7 + $0x28] sm:$0xf]
  %v342 = vld [vmem:[%s7 + $0x2c] sm:$0xf]
  %v343 = vld [vmem:[%s7 + $0x30] sm:$0xf]
  %v344 = vld [vmem:[%s7 + $0x34] sm:$0xf]
  %v345 = vld [vmem:[%s7 + $0x38] sm:$0xf]
  %v346 = vld [vmem:[%s7 + $0x3c] sm:$0xf]
  %v347 = vld [vmem:[%s8] sm:$0x1]
  %v349 = vlaneseq
  %v350 = vshrl.u32 %v349, 7
  %v351 = vsub.s32 0, %v350
  %v352 = vrot.slane %v347, %v351
  %v370 = vunpack.c.l.b16 %v331
  %v371 = vunpack.c.l.b16 %v332
  %v372 = vunpack.c.l.b16 %v333
  %v373 = vunpack.c.l.b16 %v334
  %v374 = vunpack.c.l.b16 %v335
  %v375 = vunpack.c.l.b16 %v336
  %v376 = vunpack.c.l.b16 %v337
  %v377 = vunpack.c.l.b16 %v338
  %v378 = vunpack.c.l.b16 %v339
  %v379 = vunpack.c.l.b16 %v340
  %v380 = vunpack.c.l.b16 %v341
  %v381 = vunpack.c.l.b16 %v342
  %v382 = vunpack.c.l.b16 %v343
  %v383 = vunpack.c.l.b16 %v344
  %v384 = vunpack.c.l.b16 %v345
  %v385 = vunpack.c.l.b16 %v346
  %v386 = vpack.c.b16 %v371, %v370
  %v387 = vpack.c.b16 %v373, %v372
  %v388 = vpack.c.b16 %v375, %v374
  %v389 = vpack.c.b16 %v377, %v376
  %v390 = vpack.c.b16 %v379, %v378
  %v391 = vpack.c.b16 %v381, %v380
  %v392 = vpack.c.b16 %v383, %v382
  %v393 = vpack.c.b16 %v385, %v384
  %402 = vmatprep.subr.bf16.mxu0 0
  %403 = vmatpush1.bf16.msra.mxu0 %v393
  %404 = vmatprep.subr.bf16.mxu0 0
  %405 = vmatpush1.bf16.msra.mxu0 %v392
  %406 = vmatprep.subr.bf16.mxu0 0
  %407 = vmatpush1.bf16.msra.mxu0 %v391
  %408 = vmatprep.subr.bf16.mxu0 0
  %409 = vmatpush1.bf16.msra.mxu0 %v390
  %410 = vmatprep.subr.bf16.mxu0 0
  %411 = vmatpush1.bf16.msra.mxu0 %v389
  %412 = vmatprep.subr.bf16.mxu0 0
  %413 = vmatpush1.bf16.msra.mxu0 %v388
  %414 = vmatprep.subr.bf16.mxu0 0
  %415 = vmatpush1.bf16.msra.mxu0 %v387
  %416 = vmatprep.subr.bf16.mxu0 0
  %417 = vmatpush1.bf16.msra.mxu0 %v386
  %418 = vmatprep.subr.bf16.mxu0 0
  %419 = vmatpush2.bf16.msra.mxu0 0
  %420 = vmatprep.subr.bf16.mxu0 0
  %421 = vmatpush2.bf16.msra.mxu0 0
  %422 = vmatprep.subr.bf16.mxu0 0
  %423 = vmatpush2.bf16.msra.mxu0 0
  %424 = vmatprep.subr.bf16.mxu0 0
  %425 = vmatpush2.bf16.msra.mxu0 0
  %426 = vmatprep.subr.bf16.mxu0 0
  %427 = vmatpush2.bf16.msra.mxu0 0
  %428 = vmatprep.subr.bf16.mxu0 0
  %429 = vmatpush2.bf16.msra.mxu0 0
  %430 = vmatprep.subr.bf16.mxu0 0
  %431 = vmatpush2.bf16.msra.mxu0 0
  %432 = vmatprep.subr.bf16.mxu0 0
  %433 = vmatpush2.bf16.msra.mxu0 0
  %434 = vmatprep.mubr.bf16.mxu0 0
  %435 = vmatmul.mubr.bf16.gmra.mxu0 %v329
  %v436 = vpop.f32.mrf.mxu0
  %v437 = vadd.f32 %v352, %v436
  %v438 = vpop.f32.mrf.mxu0
  %v439 = vpop.f32.mrf.mxu0
  %v440 = vadd.f32 %v352, %v439
  %v441 = vpop.f32.mrf.mxu0
  %442 = vmatprep.mubr.bf16.mxu0 0
  %443 = vmatmul.mubr.bf16.gmra.mxu0 %v330
  %v444 = vpop.f32.mrf.mxu0
  %v445 = vadd.f32 %v352, %v444
  %v446 = vpop.f32.mrf.mxu0
  %v447 = vpop.f32.mrf.mxu0
  %v448 = vadd.f32 %v352, %v447
  %v449 = vpop.f32.mrf.mxu0
  %450 = vdwg.mxu0
  %451 = vst [vmem:[%s9] sm:$0xff] %v437
  %452 = vst [vmem:[%s9 + $0x8] sm:$0xff] %v440
  %453 = vst [vmem:[%s9 + $0x10] sm:$0xff] %v445
  %454 = vst [vmem:[%s9 + $0x18] sm:$0xff] %v448
  // Predicated region
  $region38: #{mlp_forward.1} parent=0 // pred_check
    _
  $region39: #{mlp_forward.1} parent=0 // pred_check_branch
    %456 = sbr.rel (0) target = $region41
  $region40: #{mlp_forward.1} parent=0 // pred_region
    _
  $region41: #{mlp_forward.1} parent=0 // pred_fallthru
    _
  // Predicated region
  $region42: #{mlp_forward.1} parent=0 // pred_check
    _
  $region43: #{mlp_forward.1} parent=0 // pred_check_branch
    %458 = sbr.rel (0) target = $region45
  $region44: #{mlp_forward.1} parent=0 // pred_region
    _
  $region45: #{mlp_forward.1} parent=0 // pred_fallthru
    _

</llo_original>
